<compile_context>
chip_gen: v7x
topology: tpu7x:2x2x1
jax: 0.10.0
libtpu: 0.0.40
codegen_flags: <defaults>
</compile_context>

<pallas_src>
import jax
import jax.numpy as jnp
from jax.experimental import pallas as pl
from jax.experimental.pallas import tpu as pltpu


def circ_pad_kernel(x_ref, o_ref):
    # x_ref block: (B, H, W); o_ref block: (B, H+1, W+1)
    B, H, W = x_ref.shape
    x = x_ref[...]                                           # (B, H, W)
    # Assemble the padded tile in registers:
    #   rows:  prepend wrapped last row   -> (B, H+1, W)
    #   cols:  prepend wrapped last col   -> (B, H+1, W+1)
    xh = jnp.concatenate([x[:, H - 1:H, :], x], axis=1)      # (B, H+1, W)
    y = jnp.concatenate([xh[:, :, W - 1:W], xh], axis=2)     # (B, H+1, W+1)
    # One aligned, full-block store (no (1,1)-offset masked sub-stores).
    o_ref[...] = y


def _round_up(v, m):
    return -(-v // m) * m


def _tpu_chip_info():
    """Best-effort chip generation + TensorCores-per-chip (for megacore split)."""
    try:
        kind = jax.devices()[0].device_kind.lower()
    except Exception:
        return "unknown", 1
    if "v5 lite" in kind or "v5lite" in kind or "v5e" in kind:
        return "v5e", 1
    if "v6" in kind:
        return "v6e", 1
    if "7" in kind:          # e.g. 'TPU7x'
        return "v7x", 2
    return "unknown", 1


def circular_pad(x, *, target_block_bytes=None):
    """Circular pad of 1 on top (H) and left (W): (N,C,H,W) -> (N,C,H+1,W+1)."""
    N, C, H, W = x.shape
    NC = N * C
    x2 = x.reshape(NC, H, W)

    itemsize = jnp.dtype(x.dtype).itemsize
    # Sublane multiple is dtype dependent: 8 for 32-bit, 16 for bf16, 32 for int8.
    sub = max(8, 32 // max(1, itemsize))
    # Per-plane VMEM footprint (vreg-padded), input + output block rows.
    plane_bytes = (
        _round_up(H, sub) * _round_up(W, 128)
        + _round_up(H + 1, sub) * _round_up(W + 1, 128)
    ) * itemsize

    chip, num_tc = _tpu_chip_info()
    if target_block_bytes is None:
        # Padded (in+out) budget per grid step. With double buffering the resident
        # footprint is ~2x this, which stays under the scoped-VMEM defaults
        # (16 MiB on v5e, 32 MiB on v6e/v7x) without a vmem_limit_bytes override.
        target_block_bytes = (12 << 20) if chip in ("v6e", "v7x") else (6 << 20)

    b_cap = max(1, target_block_bytes // plane_bytes)
    if num_tc > 1 and NC >= 2 * num_tc:
        # v7x megacore: keep >= 2 grid steps per TensorCore so each core can
        # still overlap DMA with compute. Single-TC chips keep the largest block.
        b_cap = min(b_cap, max(1, NC // (2 * num_tc)))
    B = int(max(1, min(b_cap, NC)))

    grid = (pl.cdiv(NC, B),)   # partial last block is fine: planes are independent
    out2 = pl.pallas_call(
        circ_pad_kernel,
        out_shape=jax.ShapeDtypeStruct((NC, H + 1, W + 1), x.dtype),
        grid=grid,
        in_specs=[pl.BlockSpec((B, H, W), lambda i: (i, 0, 0))],
        out_specs=pl.BlockSpec((B, H + 1, W + 1), lambda i: (i, 0, 0)),
        compiler_params=pltpu.CompilerParams(
            dimension_semantics=("parallel",)),
    )(x2)
    return out2.reshape(N, C, H + 1, W + 1)


if __name__ == "__main__":
    key = jax.random.PRNGKey(0)
    x = jax.random.normal(key, (2, 4, 16, 16), dtype=jnp.float32)

    out = circular_pad(x)
    jax.block_until_ready(out)

    # reference: circular pad == numpy-style 'wrap' padding
    ref = jnp.pad(x, ((0, 0), (0, 0), (1, 0), (1, 0)), mode="wrap")
    assert out.shape == (2, 4, 17, 17), out.shape
    assert jnp.allclose(out, ref), "mismatch vs reference circular pad"

    print("KERNEL_OK")
</pallas_src>

<mosaic_0001>
module attributes {stable_mosaic.version = 11 : i64} {
  func.func @circ_pad_kernel(%arg0: i32, %arg1: memref<8x16x16xf32, #tpu.memory_space<vmem>>, %arg2: memref<8x17x17xf32, #tpu.memory_space<vmem>>) attributes {dimension_semantics = [#tpu.dimension_semantics<parallel>], iteration_bounds = array<i64: 1>, scalar_prefetch = 0 : i64, scratch_operands = 0 : i64, tpu.core_type = #tpu.core_type<tc>, window_params = [{transform_indices = @transform_0, window_bounds = array<i64: 8, 16, 16>}, {transform_indices = @transform_1, window_bounds = array<i64: 8, 17, 17>}]} {
    %c0 = arith.constant 0 : index
    %c0_0 = arith.constant 0 : index
    %c0_1 = arith.constant 0 : index
    %0 = vector.load %arg1[%c0, %c0_0, %c0_1] : memref<8x16x16xf32, #tpu.memory_space<vmem>>, vector<8x16x16xf32>
    %1 = vector.extract_strided_slice %0 {offsets = [0, 15, 0], sizes = [8, 1, 16], strides = [1, 1, 1]} : vector<8x16x16xf32> to vector<8x1x16xf32>
    %2 = tpu.concatenate %1, %0 in 1 : vector<8x1x16xf32>, vector<8x16x16xf32> -> vector<8x17x16xf32>
    %3 = vector.extract_strided_slice %2 {offsets = [0, 0, 15], sizes = [8, 17, 1], strides = [1, 1, 1]} : vector<8x17x16xf32> to vector<8x17x1xf32>
    %4 = tpu.concatenate %3, %2 in 2 : vector<8x17x1xf32>, vector<8x17x16xf32> -> vector<8x17x17xf32>
    %c0_2 = arith.constant 0 : index
    %c0_3 = arith.constant 0 : index
    %c0_4 = arith.constant 0 : index
    %5 = vector.load %arg2[%c0_2, %c0_3, %c0_4] : memref<8x17x17xf32, #tpu.memory_space<vmem>>, vector<8x17x17xf32>
    tpu.vector_store %arg2[%c0_2, %c0_3, %c0_4], %4 {strides = array<i32>} : memref<8x17x17xf32, #tpu.memory_space<vmem>>, vector<8x17x17xf32>,
    return
  }
  func.func @transform_0(%arg0: i32) -> (i32, i32, i32) {
    %c0_i32 = arith.constant 0 : i32
    %c0_i32_0 = arith.constant 0 : i32
    %c0_i32_1 = arith.constant 0 : i32
    return %arg0, %c0_i32, %c0_i32_0 : i32, i32, i32
  }
  func.func @transform_1(%arg0: i32) -> (i32, i32, i32) {
    %c0_i32 = arith.constant 0 : i32
    %c0_i32_0 = arith.constant 0 : i32
    %c0_i32_1 = arith.constant 0 : i32
    return %arg0, %c0_i32, %c0_i32_0 : i32, i32, i32
  }
}

</mosaic_0001>

<llo_original>
// kernel: tpu_custom_call.1
$region0: #{tpu_custom_call.1}
  #allocation0 [shape = 'u32[]', space=smem, size = 0x4, offset = 0x4, fixed_abs, tag = 'smem constant byte address 0x4 - core index']
  #allocation1 [shape = 'u32[144,128]{1,0:T(1,128)}', space=vmem, size = 0x12000, scoped, tag = 'internal scratch']
  %s0 = inlined_call_operand.hbm [shape: f32[8,16,16], index: 0, kind: input, shape index: {}]
  %s1 = inlined_call_operand.vmem [shape: f32[8,17,17], index: 1, kind: output, shape index: {}]
  %s2 = sld [smem:[#allocation0]]
  $region18: #{tpu_custom_call.1} parent=0
    _
  %s4 = ssub.s32 1, %s2
  %s5 = scalar_select 0, %s4, %s2
  $region1: #{tpu_custom_call.1} parent=0
    #allocation2 [shape = 'u8[65536]{0}', space=vmem, size = 0x10000, scoped, tag = 'input window, operand 0, single buffered']
    #allocation3 [shape = 's32[1]{0}', space=sflag, size = 0x4, scoped, tag = 'scoped memory for tpu_custom_call.1']
    %6 = vsyncpa [#allocation3], 0
    // Predicated region
    $region2: #{tpu_custom_call.1} parent=1 // pred_check
      _
    $region3: #{tpu_custom_call.1} parent=1 // pred_check_branch
      %8 = sbr.rel (0) target = $region5
    $region4: #{tpu_custom_call.1} parent=1 // pred_region
      %s10 = ssub.s32 2048, 2048
      %11 = vsyncadd [#allocation3], %s10
      %s12 = sshll.u32 [#allocation2], 4
      %s13 = int_to_ptr.vmem [resolvable:$true] %s12
      %18 = dma.hbm_to_vmem [thread:$0]  %s0, 2048, %s13, [#allocation3], 128, 128, 8
    $region5: #{tpu_custom_call.1} parent=1 // pred_fallthru
      _
    // Predicated region
    $region6: #{tpu_custom_call.1} parent=1 // pred_check
      _
    $region7: #{tpu_custom_call.1} parent=1 // pred_check_branch
      %20 = sbr.rel (0) target = $region9
    $region8: #{tpu_custom_call.1} parent=1 // pred_region
      %21 = dma.done [#allocation3], 2048
    $region9: #{tpu_custom_call.1} parent=1 // pred_fallthru
      _
    %v22 = vld [vmem:[#allocation2] sm:$0xff]
    %v23 = vld [vmem:[#allocation2 + $0x8] sm:$0xff]
    %v24 = vld [vmem:[#allocation2 + $0x10] sm:$0xff]
    %v25 = vld [vmem:[#allocation2 + $0x18] sm:$0xff]
    %v26 = vld [vmem:[#allocation2 + $0x20] sm:$0xff]
    %v27 = vld [vmem:[#allocation2 + $0x28] sm:$0xff]
    %v28 = vld [vmem:[#allocation2 + $0x30] sm:$0xff]
    %v29 = vld [vmem:[#allocation2 + $0x38] sm:$0xff]
    %v30 = vld [vmem:[#allocation2 + $0x40] sm:$0xff]
    %v31 = vld [vmem:[#allocation2 + $0x48] sm:$0xff]
    %v32 = vld [vmem:[#allocation2 + $0x50] sm:$0xff]
    %v33 = vld [vmem:[#allocation2 + $0x58] sm:$0xff]
    %v34 = vld [vmem:[#allocation2 + $0x60] sm:$0xff]
    %v35 = vld [vmem:[#allocation2 + $0x68] sm:$0xff]
    %v36 = vld [vmem:[#allocation2 + $0x70] sm:$0xff]
    %v37 = vld [vmem:[#allocation2 + $0x78] sm:$0xff]
    %v46 = vrot.slane %v23, 7
    %v47 = vrot.slane %v25, 7
    %v48 = vrot.slane %v27, 7
    %v49 = vrot.slane %v29, 7
    %v50 = vrot.slane %v31, 7
    %v51 = vrot.slane %v33, 7
    %v52 = vrot.slane %v35, 7
    %v53 = vrot.slane %v37, 7
    %vm70 = vcmask 1040384
    %v71 = vrot.slane %v22, 7
    %v72 = vsel %vm70, %v71, %v46
    %v73 = vrot.slane %v24, 7
    %v74 = vsel %vm70, %v73, %v47
    %v75 = vrot.slane %v26, 7
    %v76 = vsel %vm70, %v75, %v48
    %v77 = vrot.slane %v28, 7
    %v78 = vsel %vm70, %v77, %v49
    %v79 = vrot.slane %v30, 7
    %v80 = vsel %vm70, %v79, %v50
    %v81 = vrot.slane %v32, 7
    %v82 = vsel %vm70, %v81, %v51
    %v83 = vrot.slane %v34, 7
    %v84 = vsel %vm70, %v83, %v52
    %v85 = vrot.slane %v36, 7
    %v86 = vsel %vm70, %v85, %v53
    %v95 = vsel %vm70, %v46, %v71
    %v96 = vsel %vm70, %v47, %v73
    %v97 = vsel %vm70, %v48, %v75
    %v98 = vsel %vm70, %v49, %v77
    %v99 = vsel %vm70, %v50, %v79
    %v100 = vsel %vm70, %v51, %v81
    %v101 = vsel %vm70, %v52, %v83
    %v102 = vsel %vm70, %v53, %v85
    %111 = vrot.lane.b32.xlu0 %v95, 113
    %v112 = vpop.permute.xlu0 %111
    %113 = vrot.lane.b32.xlu0 %v72, 113
    %v114 = vpop.permute.xlu0 %113
    %115 = vrot.lane.b32.xlu0 %v46, 113
    %v116 = vpop.permute.xlu0 %115
    %117 = vrot.lane.b32.xlu0 %v96, 113
    %v118 = vpop.permute.xlu0 %117
    %119 = vrot.lane.b32.xlu0 %v74, 113
    %v120 = vpop.permute.xlu0 %119
    %121 = vrot.lane.b32.xlu0 %v47, 113
    %v122 = vpop.permute.xlu0 %121
    %123 = vrot.lane.b32.xlu0 %v97, 113
    %v124 = vpop.permute.xlu0 %123
    %125 = vrot.lane.b32.xlu0 %v76, 113
    %v126 = vpop.permute.xlu0 %125
    %127 = vrot.lane.b32.xlu0 %v48, 113
    %v128 = vpop.permute.xlu0 %127
    %129 = vrot.lane.b32.xlu0 %v98, 113
    %v130 = vpop.permute.xlu0 %129
    %131 = vrot.lane.b32.xlu0 %v78, 113
    %v132 = vpop.permute.xlu0 %131
    %133 = vrot.lane.b32.xlu0 %v49, 113
    %v134 = vpop.permute.xlu0 %133
    %135 = vrot.lane.b32.xlu0 %v99, 113
    %v136 = vpop.permute.xlu0 %135
    %137 = vrot.lane.b32.xlu0 %v80, 113
    %v138 = vpop.permute.xlu0 %137
    %139 = vrot.lane.b32.xlu0 %v50, 113
    %v140 = vpop.permute.xlu0 %139
    %141 = vrot.lane.b32.xlu0 %v100, 113
    %v142 = vpop.permute.xlu0 %141
    %143 = vrot.lane.b32.xlu0 %v82, 113
    %v144 = vpop.permute.xlu0 %143
    %145 = vrot.lane.b32.xlu0 %v51, 113
    %v146 = vpop.permute.xlu0 %145
    %147 = vrot.lane.b32.xlu0 %v101, 113
    %v148 = vpop.permute.xlu0 %147
    %149 = vrot.lane.b32.xlu0 %v84, 113
    %v150 = vpop.permute.xlu0 %149
    %151 = vrot.lane.b32.xlu0 %v52, 113
    %v152 = vpop.permute.xlu0 %151
    %153 = vrot.lane.b32.xlu0 %v102, 113
    %v154 = vpop.permute.xlu0 %153
    %155 = vrot.lane.b32.xlu0 %v86, 113
    %v156 = vpop.permute.xlu0 %155
    %157 = vrot.lane.b32.xlu0 %v53, 113
    %v158 = vpop.permute.xlu0 %157
    %183 = vrot.lane.b32.xlu0 %v95, 1
    %v184 = vpop.permute.xlu0 %183
    %185 = vrot.lane.b32.xlu0 %v72, 1
    %v186 = vpop.permute.xlu0 %185
    %187 = vrot.lane.b32.xlu0 %v46, 1
    %v188 = vpop.permute.xlu0 %187
    %189 = vrot.lane.b32.xlu0 %v96, 1
    %v190 = vpop.permute.xlu0 %189
    %191 = vrot.lane.b32.xlu0 %v74, 1
    %v192 = vpop.permute.xlu0 %191
    %193 = vrot.lane.b32.xlu0 %v47, 1
    %v194 = vpop.permute.xlu0 %193
    %195 = vrot.lane.b32.xlu0 %v97, 1
    %v196 = vpop.permute.xlu0 %195
    %197 = vrot.lane.b32.xlu0 %v76, 1
    %v198 = vpop.permute.xlu0 %197
    %199 = vrot.lane.b32.xlu0 %v48, 1
    %v200 = vpop.permute.xlu0 %199
    %201 = vrot.lane.b32.xlu0 %v98, 1
    %v202 = vpop.permute.xlu0 %201
    %203 = vrot.lane.b32.xlu0 %v78, 1
    %v204 = vpop.permute.xlu0 %203
    %205 = vrot.lane.b32.xlu0 %v49, 1
    %v206 = vpop.permute.xlu0 %205
    %207 = vrot.lane.b32.xlu0 %v99, 1
    %v208 = vpop.permute.xlu0 %207
    %209 = vrot.lane.b32.xlu0 %v80, 1
    %v210 = vpop.permute.xlu0 %209
    %211 = vrot.lane.b32.xlu0 %v50, 1
    %v212 = vpop.permute.xlu0 %211
    %213 = vrot.lane.b32.xlu0 %v100, 1
    %v214 = vpop.permute.xlu0 %213
    %215 = vrot.lane.b32.xlu0 %v82, 1
    %v216 = vpop.permute.xlu0 %215
    %217 = vrot.lane.b32.xlu0 %v51, 1
    %v218 = vpop.permute.xlu0 %217
    %219 = vrot.lane.b32.xlu0 %v101, 1
    %v220 = vpop.permute.xlu0 %219
    %221 = vrot.lane.b32.xlu0 %v84, 1
    %v222 = vpop.permute.xlu0 %221
    %223 = vrot.lane.b32.xlu0 %v52, 1
    %v224 = vpop.permute.xlu0 %223
    %225 = vrot.lane.b32.xlu0 %v102, 1
    %v226 = vpop.permute.xlu0 %225
    %227 = vrot.lane.b32.xlu0 %v86, 1
    %v228 = vpop.permute.xlu0 %227
    %229 = vrot.lane.b32.xlu0 %v53, 1
    %v230 = vpop.permute.xlu0 %229
    %vm255 = vcmask 7168
    %v256 = vsel %vm255, %v112, %v184
    %v257 = vsel %vm255, %v114, %v186
    %v258 = vsel %vm255, %v116, %v188
    %v259 = vsel %vm255, %v118, %v190
    %v260 = vsel %vm255, %v120, %v192
    %v261 = vsel %vm255, %v122, %v194
    %v262 = vsel %vm255, %v124, %v196
    %v263 = vsel %vm255, %v126, %v198
    %v264 = vsel %vm255, %v128, %v200
    %v265 = vsel %vm255, %v130, %v202
    %v266 = vsel %vm255, %v132, %v204
    %v267 = vsel %vm255, %v134, %v206
    %v268 = vsel %vm255, %v136, %v208
    %v269 = vsel %vm255, %v138, %v210
    %v270 = vsel %vm255, %v140, %v212
    %v271 = vsel %vm255, %v142, %v214
    %v272 = vsel %vm255, %v144, %v216
    %v273 = vsel %vm255, %v146, %v218
    %v274 = vsel %vm255, %v148, %v220
    %v275 = vsel %vm255, %v150, %v222
    %v276 = vsel %vm255, %v152, %v224
    %v277 = vsel %vm255, %v154, %v226
    %v278 = vsel %vm255, %v156, %v228
    %v279 = vsel %vm255, %v158, %v230
    %vm280 = vcmask 138240
    %281 = vst.msk [vmem:[%s1] sm:$0xff] %vm280, %v256
    %282 = vst.msk [vmem:[%s1 + $0x8] sm:$0xff] %vm280, %v257
    %vm283 = vcmask 131072
    %284 = vst.msk [vmem:[%s1 + $0x10] sm:$0x1] %vm283, %v258
    %285 = vst.msk [vmem:[%s1 + $0x18] sm:$0xff] %vm280, %v259
    %286 = vst.msk [vmem:[%s1 + $0x20] sm:$0xff] %vm280, %v260
    %287 = vst.msk [vmem:[%s1 + $0x28] sm:$0x1] %vm283, %v261
    %288 = vst.msk [vmem:[%s1 + $0x30] sm:$0xff] %vm280, %v262
    %289 = vst.msk [vmem:[%s1 + $0x38] sm:$0xff] %vm280, %v263
    %290 = vst.msk [vmem:[%s1 + $0x40] sm:$0x1] %vm283, %v264
    %291 = vst.msk [vmem:[%s1 + $0x48] sm:$0xff] %vm280, %v265
    %292 = vst.msk [vmem:[%s1 + $0x50] sm:$0xff] %vm280, %v266
    %293 = vst.msk [vmem:[%s1 + $0x58] sm:$0x1] %vm283, %v267
    %294 = vst.msk [vmem:[%s1 + $0x60] sm:$0xff] %vm280, %v268
    %295 = vst.msk [vmem:[%s1 + $0x68] sm:$0xff] %vm280, %v269
    %296 = vst.msk [vmem:[%s1 + $0x70] sm:$0x1] %vm283, %v270
    %297 = vst.msk [vmem:[%s1 + $0x78] sm:$0xff] %vm280, %v271
    %298 = vst.msk [vmem:[%s1 + $0x80] sm:$0xff] %vm280, %v272
    %299 = vst.msk [vmem:[%s1 + $0x88] sm:$0x1] %vm283, %v273
    %300 = vst.msk [vmem:[%s1 + $0x90] sm:$0xff] %vm280, %v274
    %301 = vst.msk [vmem:[%s1 + $0x98] sm:$0xff] %vm280, %v275
    %302 = vst.msk [vmem:[%s1 + $0xa0] sm:$0x1] %vm283, %v276
    %303 = vst.msk [vmem:[%s1 + $0xa8] sm:$0xff] %vm280, %v277
    %304 = vst.msk [vmem:[%s1 + $0xb0] sm:$0xff] %vm280, %v278
    %305 = vst.msk [vmem:[%s1 + $0xb8] sm:$0x1] %vm283, %v279
    // Predicated region
    $region10: #{tpu_custom_call.1} parent=1 // pred_check
      _
    $region11: #{tpu_custom_call.1} parent=1 // pred_check_branch
      %307 = sbr.rel (0) target = $region13
    $region12: #{tpu_custom_call.1} parent=1 // pred_region
      _
    $region13: #{tpu_custom_call.1} parent=1 // pred_fallthru
      _
    // Predicated region
    $region14: #{tpu_custom_call.1} parent=1 // pred_check
      _
    $region15: #{tpu_custom_call.1} parent=1 // pred_check_branch
      %309 = sbr.rel (0) target = $region17
    $region16: #{tpu_custom_call.1} parent=1 // pred_region
      _
    $region17: #{tpu_custom_call.1} parent=1 // pred_fallthru
      _
    %310 = vsyncpa [#allocation3], 1

</llo_original>
